<compile_context>
chip_gen: v5e
topology: v5e:2x2
jax: 0.10.0
libtpu: 0.0.40
codegen_flags: <defaults>
</compile_context>

<pallas_src>
import functools

import jax
import jax.numpy as jnp
from jax.experimental import pallas as pl
from jax.experimental.pallas import tpu as pltpu

_LANES = 128
_SUBLANES = 8
_MAX_TILE_ROWS = 2048   # 2048 x 128 f32 = 1 MiB per operand tile
_NUM_CORES = 2          # leading "parallel" grid axis (v7x megacore; no-op on 1-TC chips)


def _dice_partial_kernel(x_ref, y_ref, out_ref, acc_xy_ref, acc_s_ref, *,
                         rows_per_core, tile_rows):
    i = pl.program_id(1)

    @pl.when(i == 0)
    def _init():
        acc_xy_ref[...] = jnp.zeros_like(acc_xy_ref)
        acc_s_ref[...] = jnp.zeros_like(acc_s_ref)

    x = x_ref[...].astype(jnp.float32)
    y = y_ref[...].astype(jnp.float32)

    # Only the last tile of each core chunk can run past the array; its
    # out-of-bounds contents are undefined, so mask them (static decision).
    if rows_per_core % tile_rows != 0:
        row_ids = i * tile_rows + jax.lax.broadcasted_iota(
            jnp.int32, (tile_rows, _LANES), 0)
        valid = row_ids < rows_per_core
        x = jnp.where(valid, x, 0.0)
        y = jnp.where(valid, y, 0.0)

    # Pure element-wise accumulation (VPU only) in the steady state.
    acc_xy_ref[...] += x * y
    acc_s_ref[...] += x + y

    @pl.when(i == pl.num_programs(1) - 1)
    def _finalize():
        sxy = jnp.sum(acc_xy_ref[...])
        ss = jnp.sum(acc_s_ref[...])
        row = jax.lax.broadcasted_iota(jnp.int32, (_SUBLANES, _LANES), 0)
        # row 0 carries sum(x*y), row 1 carries sum(x)+sum(y).
        out_ref[...] = jnp.where(row == 0, sxy, jnp.where(row == 1, ss, 0.0))


def dice_loss(inputs, targets, smooth=1.0):
    """Pallas implementation of DiceLoss.forward (returns a scalar f32)."""
    x = jnp.ravel(inputs)
    y = jnp.ravel(targets)
    # Keep native floating dtypes (bf16 etc.) to avoid an extra HBM pass;
    # only integer/bool targets get promoted.
    if not jnp.issubdtype(x.dtype, jnp.floating):
        x = x.astype(jnp.float32)
    if not jnp.issubdtype(y.dtype, jnp.floating):
        y = y.astype(jnp.float32)
    n = x.shape[0]

    # Pad only to the minimal core-aligned granularity (decoupled from the
    # tile size).  Zero padding leaves all sums unchanged; aligned inputs
    # skip the copy entirely.
    align = _NUM_CORES * _SUBLANES * _LANES
    padded = pl.cdiv(n, align) * align
    if padded != n:
        x = jnp.pad(x, (0, padded - n))
        y = jnp.pad(y, (0, padded - n))

    rows = padded // _LANES
    rows_per_core = rows // _NUM_CORES
    tile_rows = min(_MAX_TILE_ROWS, rows_per_core)
    steps = pl.cdiv(rows_per_core, tile_rows)

    x3 = x.reshape(_NUM_CORES, rows_per_core, _LANES)
    y3 = y.reshape(_NUM_CORES, rows_per_core, _LANES)

    kernel = functools.partial(
        _dice_partial_kernel,
        rows_per_core=rows_per_core,
        tile_rows=tile_rows,
    )

    partials = pl.pallas_call(
        kernel,
        out_shape=jax.ShapeDtypeStruct((_NUM_CORES, _SUBLANES, _LANES),
                                       jnp.float32),
        grid_spec=pltpu.PrefetchScalarGridSpec(
            num_scalar_prefetch=0,
            grid=(_NUM_CORES, steps),
            in_specs=[
                pl.BlockSpec((None, tile_rows, _LANES), lambda c, i: (c, i, 0)),
                pl.BlockSpec((None, tile_rows, _LANES), lambda c, i: (c, i, 0)),
            ],
            out_specs=pl.BlockSpec((None, _SUBLANES, _LANES),
                                   lambda c, i: (c, 0, 0)),
            scratch_shapes=[
                pltpu.VMEM((tile_rows, _LANES), jnp.float32),
                pltpu.VMEM((tile_rows, _LANES), jnp.float32),
            ],
        ),
        compiler_params=pltpu.CompilerParams(
            dimension_semantics=("parallel", "arbitrary"),
        ),
    )(x3, y3)

    sum_xy = jnp.sum(partials[:, 0, 0])        # intersection
    sum_s = jnp.sum(partials[:, 1, 0])         # sum(inputs) + sum(targets)
    dice = (2.0 * sum_xy + smooth) / (sum_s + smooth)
    return 1.0 - dice


def _dice_loss_ref(inputs, targets, smooth=1.0):
    x = jnp.ravel(inputs).astype(jnp.float32)
    y = jnp.ravel(targets).astype(jnp.float32)
    intersection = jnp.sum(x * y)
    dice = (2.0 * intersection + smooth) / (jnp.sum(x) + jnp.sum(y) + smooth)
    return 1.0 - dice


if __name__ == "__main__":
    key = jax.random.PRNGKey(0)
    k1, k2 = jax.random.split(key)

    # Small shapes consistent with a segmentation head: N=2, C=4, H=W=16.
    inputs = jax.nn.sigmoid(jax.random.normal(k1, (2, 4, 16, 16), jnp.float32))
    targets = (jax.random.uniform(k2, (2, 4, 16, 16)) > 0.5).astype(jnp.float32)

    loss = jax.block_until_ready(dice_loss(inputs, targets, smooth=1.0))
    ref = jax.block_until_ready(_dice_loss_ref(inputs, targets, smooth=1.0))

    assert jnp.allclose(loss, ref, rtol=1e-5, atol=1e-6), (loss, ref)
    print("KERNEL_OK")
</pallas_src>

<mosaic_0001>
module attributes {stable_mosaic.version = 11 : i64} {
  func.func @_dice_partial_kernel(%arg0: i32, %arg1: i32, %arg2: memref<1x8x128xf32, #tpu.memory_space<vmem>>, %arg3: memref<1x8x128xf32, #tpu.memory_space<vmem>>, %arg4: memref<1x8x128xf32, #tpu.memory_space<vmem>>, %arg5: memref<8x128xf32, #tpu.memory_space<vmem>>, %arg6: memref<8x128xf32, #tpu.memory_space<vmem>>) attributes {dimension_semantics = [#tpu.dimension_semantics<parallel>, #tpu.dimension_semantics<arbitrary>], iteration_bounds = array<i64: 2, 1>, scalar_prefetch = 0 : i64, scratch_operands = 2 : i64, tpu.core_type = #tpu.core_type<tc>, window_params = [{transform_indices = @transform_0, window_bounds = array<i64: 1, 8, 128>}, {transform_indices = @transform_1, window_bounds = array<i64: 1, 8, 128>}, {transform_indices = @transform_2, window_bounds = array<i64: 1, 8, 128>}]} {
    %c0_i32 = arith.constant 0 : i32
    %0 = arith.cmpi eq, %arg1, %c0_i32 : i32
    %1 = arith.extui %0 : i1 to i32
    %c0_i32_0 = arith.constant 0 : i32
    %2 = arith.cmpi ne, %1, %c0_i32_0 : i32
    scf.if %2 {
      %cst = arith.constant 0.000000e+00 : f32
      %18 = vector.broadcast %cst : f32 to vector<8x128xf32>
      %c0_16 = arith.constant 0 : index
      %c0_17 = arith.constant 0 : index
      %19 = vector.load %arg5[%c0_16, %c0_17] : memref<8x128xf32, #tpu.memory_space<vmem>>, vector<8x128xf32>
      tpu.vector_store %arg5[%c0_16, %c0_17], %18 {strides = array<i32>} : memref<8x128xf32, #tpu.memory_space<vmem>>, vector<8x128xf32>,
      %cst_18 = arith.constant 0.000000e+00 : f32
      %20 = vector.broadcast %cst_18 : f32 to vector<8x128xf32>
      %c0_19 = arith.constant 0 : index
      %c0_20 = arith.constant 0 : index
      %21 = vector.load %arg6[%c0_19, %c0_20] : memref<8x128xf32, #tpu.memory_space<vmem>>, vector<8x128xf32>
      tpu.vector_store %arg6[%c0_19, %c0_20], %20 {strides = array<i32>} : memref<8x128xf32, #tpu.memory_space<vmem>>, vector<8x128xf32>,
    } else {
    }
    %c0 = arith.constant 0 : index
    %c0_1 = arith.constant 0 : index
    %c0_2 = arith.constant 0 : index
    %3 = vector.load %arg2[%c0, %c0_1, %c0_2] : memref<1x8x128xf32, #tpu.memory_space<vmem>>, vector<1x8x128xf32>
    %4 = vector.shape_cast %3 : vector<1x8x128xf32> to vector<8x128xf32>
    %c0_3 = arith.constant 0 : index
    %c0_4 = arith.constant 0 : index
    %c0_5 = arith.constant 0 : index
    %5 = vector.load %arg3[%c0_3, %c0_4, %c0_5] : memref<1x8x128xf32, #tpu.memory_space<vmem>>, vector<1x8x128xf32>
    %6 = vector.shape_cast %5 : vector<1x8x128xf32> to vector<8x128xf32>
    %c0_6 = arith.constant 0 : index
    %c0_7 = arith.constant 0 : index
    %7 = vector.load %arg5[%c0_6, %c0_7] : memref<8x128xf32, #tpu.memory_space<vmem>>, vector<8x128xf32>
    %8 = arith.mulf %4, %6 : vector<8x128xf32>
    %9 = arith.addf %7, %8 : vector<8x128xf32>
    %c0_8 = arith.constant 0 : index
    %c0_9 = arith.constant 0 : index
    %10 = vector.load %arg5[%c0_8, %c0_9] : memref<8x128xf32, #tpu.memory_space<vmem>>, vector<8x128xf32>
    tpu.vector_store %arg5[%c0_8, %c0_9], %9 {strides = array<i32>} : memref<8x128xf32, #tpu.memory_space<vmem>>, vector<8x128xf32>,
    %c0_10 = arith.constant 0 : index
    %c0_11 = arith.constant 0 : index
    %11 = vector.load %arg6[%c0_10, %c0_11] : memref<8x128xf32, #tpu.memory_space<vmem>>, vector<8x128xf32>
    %12 = arith.addf %4, %6 : vector<8x128xf32>
    %13 = arith.addf %11, %12 : vector<8x128xf32>
    %c0_12 = arith.constant 0 : index
    %c0_13 = arith.constant 0 : index
    %14 = vector.load %arg6[%c0_12, %c0_13] : memref<8x128xf32, #tpu.memory_space<vmem>>, vector<8x128xf32>
    tpu.vector_store %arg6[%c0_12, %c0_13], %13 {strides = array<i32>} : memref<8x128xf32, #tpu.memory_space<vmem>>, vector<8x128xf32>,
    %c0_i32_14 = arith.constant 0 : i32
    %15 = arith.cmpi eq, %arg1, %c0_i32_14 : i32
    %16 = arith.extui %15 : i1 to i32
    %c0_i32_15 = arith.constant 0 : i32
    %17 = arith.cmpi ne, %16, %c0_i32_15 : i32
    scf.if %17 {
      %c0_16 = arith.constant 0 : index
      %c0_17 = arith.constant 0 : index
      %18 = vector.load %arg5[%c0_16, %c0_17] : memref<8x128xf32, #tpu.memory_space<vmem>>, vector<8x128xf32>
      %19 = vector.shape_cast %18 : vector<8x128xf32> to vector<1x8x128xf32>
      %cst = arith.constant dense<0.000000e+00> : vector<1xf32>
      %20 = vector.multi_reduction <add>, %19, %cst [1, 2] : vector<1x8x128xf32> to vector<1xf32>
      %21 = vector.shape_cast %20 : vector<1xf32> to vector<1x1x1xf32>
      %22 = vector.extract %21[0, 0, 0] : f32 from vector<1x1x1xf32>
      %c0_18 = arith.constant 0 : index
      %c0_19 = arith.constant 0 : index
      %23 = vector.load %arg6[%c0_18, %c0_19] : memref<8x128xf32, #tpu.memory_space<vmem>>, vector<8x128xf32>
      %24 = vector.shape_cast %23 : vector<8x128xf32> to vector<1x8x128xf32>
      %cst_20 = arith.constant dense<0.000000e+00> : vector<1xf32>
      %25 = vector.multi_reduction <add>, %24, %cst_20 [1, 2] : vector<1x8x128xf32> to vector<1xf32>
      %26 = vector.shape_cast %25 : vector<1xf32> to vector<1x1x1xf32>
      %27 = vector.extract %26[0, 0, 0] : f32 from vector<1x1x1xf32>
      %28 = tpu.iota {dimensions = array<i32: 0>} : vector<8x128xi32>
      %c0_i32_21 = arith.constant 0 : i32
      %29 = vector.broadcast %c0_i32_21 : i32 to vector<8x128xi32>
      %30 = arith.cmpi eq, %28, %29 : vector<8x128xi32>
      %c1_i32 = arith.constant 1 : i32
      %31 = vector.broadcast %c1_i32 : i32 to vector<8x128xi32>
      %32 = arith.cmpi eq, %28, %31 : vector<8x128xi32>
      %cst_22 = arith.constant 0.000000e+00 : f32
      %33 = vector.broadcast %27 : f32 to vector<8x128xf32>
      %34 = vector.broadcast %cst_22 : f32 to vector<8x128xf32>
      %35 = arith.select %32, %33, %34 : vector<8x128xi1>, vector<8x128xf32>
      %36 = vector.broadcast %22 : f32 to vector<8x128xf32>
      %37 = arith.select %30, %36, %35 : vector<8x128xi1>, vector<8x128xf32>
      %c0_23 = arith.constant 0 : index
      %c0_24 = arith.constant 0 : index
      %c0_25 = arith.constant 0 : index
      %38 = vector.load %arg4[%c0_23, %c0_24, %c0_25] : memref<1x8x128xf32, #tpu.memory_space<vmem>>, vector<1x8x128xf32>
      %39 = vector.shape_cast %38 : vector<1x8x128xf32> to vector<8x128xf32>
      %40 = vector.shape_cast %37 : vector<8x128xf32> to vector<1x8x128xf32>
      tpu.vector_store %arg4[%c0_23, %c0_24, %c0_25], %40 {strides = array<i32>} : memref<1x8x128xf32, #tpu.memory_space<vmem>>, vector<1x8x128xf32>,
    } else {
    }
    return
  }
  func.func @transform_0(%arg0: i32, %arg1: i32) -> (i32, i32, i32) {
    %c0_i32 = arith.constant 0 : i32
    %c0_i32_0 = arith.constant 0 : i32
    return %arg0, %arg1, %c0_i32 : i32, i32, i32
  }
  func.func @transform_1(%arg0: i32, %arg1: i32) -> (i32, i32, i32) {
    %c0_i32 = arith.constant 0 : i32
    %c0_i32_0 = arith.constant 0 : i32
    return %arg0, %arg1, %c0_i32 : i32, i32, i32
  }
  func.func @transform_2(%arg0: i32, %arg1: i32) -> (i32, i32, i32) {
    %c0_i32 = arith.constant 0 : i32
    %c0_i32_0 = arith.constant 0 : i32
    %c0_i32_1 = arith.constant 0 : i32
    return %arg0, %c0_i32, %c0_i32_0 : i32, i32, i32
  }
}

</mosaic_0001>

<llo_original>
// kernel: tpu_custom_call.1
$region0: #{tpu_custom_call.1}
  #allocation0 [shape = 'u32[]', space=smem, size = 0x4, offset = 0x4, fixed_abs, tag = 'smem constant byte address 0x4 - core index']
  #allocation1 [shape = 'u32[72,128]{1,0:T(1,128)}', space=vmem, size = 0x9000, scoped, tag = 'internal scratch']
  #allocation2 [shape = 'f32[8,128]{1,0:T(8,128)}', space=vmem, size = 0x1000, scoped, tag = 'scratch operand']
  #allocation3 [shape = 'f32[8,128]{1,0:T(8,128)}', space=vmem, size = 0x1000, scoped, tag = 'scratch operand']
  %s0 = inlined_call_operand.hbm [shape: f32[2,8,128], index: 0, kind: input, shape index: {}]
  %s1 = inlined_call_operand.hbm [shape: f32[2,8,128], index: 1, kind: input, shape index: {}]
  %s2 = inlined_call_operand.hbm [shape: f32[2,8,128], index: 2, kind: output, shape index: {}]
  %s3 = sld [smem:[#allocation0]]
  $region57: #{tpu_custom_call.1} parent=0
    _
  %s5 = ssub.s32 1, %s3
  %s6 = scalar_select 0, %s5, %s3
  $region1: #{tpu_custom_call.1} parent=0
    #allocation4 [shape = 'u8[8192]{0}', space=vmem, size = 0x2000, scoped, tag = 'input window, operand 0']
    #allocation5 [shape = 's32[2]{0}', space=sflag, size = 0x8, scoped, tag = 'scoped memory for tpu_custom_call.1']
    #allocation6 [shape = 's32[2]{0}', space=sflag, size = 0x8, scoped, tag = 'scoped memory for tpu_custom_call.1']
    #allocation7 [shape = 'u8[8192]{0}', space=vmem, size = 0x2000, scoped, tag = 'input window, operand 1']
    #allocation8 [shape = 's32[2]{0}', space=sflag, size = 0x8, scoped, tag = 'scoped memory for tpu_custom_call.1']
    #allocation9 [shape = 'u8[8192]{0}', space=vmem, size = 0x2000, scoped, tag = 'output window, operand 0']
    %7 = vsyncpa [#allocation5], 0
    %s8 = scalar_lea.sflag [#allocation5], 1
    %9 = vsyncpa %s8, 0
    %10 = vsyncpa [#allocation8], 0
    %s11 = scalar_lea.sflag [#allocation8], 1
    %12 = vsyncpa %s11, 0
    %13 = vsyncpa [#allocation6], 0
    %s14 = scalar_lea.sflag [#allocation6], 1
    %15 = vsyncpa %s14, 0
    loop: start=0, step=1, limit=4
    $region2: #{tpu_custom_call.1} parent=1 // loop_pre_header
      _
    $region3: #{tpu_custom_call.1} parent=1 // loop_header
      %s17 = sphi 0, %s21
      %p18 = scmp.ge.s32.totalorder %s17, 4
      %s24 = sphi 0, %s36
      %s25 = sphi 0, %s32
      %s26 = sphi 0, %s24
      %s27 = sphi 0, %s25
      %s28 = sphi 0, %s26
      %s29 = sphi 0, %s27
      %s41 = sphi 0, %s43
      %s44 = sphi 0, %s41
      %s45 = sphi 0, %s44
      %s61 = sphi 0, %s45
      %s69 = sphi 0, %s71
      %s72 = sphi 0, %s69
      %s73 = sphi 0, %s72
      %s89 = sphi 0, %s73
      %s95 = sphi 0, %s97
      %s98 = sphi 0, %s95
      %s99 = sphi 0, %s98
      %s115 = sphi 0, %s99
    $region4: #{tpu_custom_call.1} parent=1 // loop_header_branch
      %20 = sbr.rel (%p18) target = $region8
    $region5: #{tpu_custom_call.1} parent=1 // loop_body
      %s22 = ssub.s32 %s17, 1
      %s23 = ssub.s32 %s17, 2
      %s30 = sadd.s32 1, %s25
      %p31 = scmp.ge.s32.totalorder %s30, 1
      %s32 = scalar_select %p31, 0, %s30
      %s33 = sadd.s32 1, %s24
      %s34 = scalar_select %p31, %s33, %s24
      %p35 = scmp.ge.s32.totalorder %s34, 2
      %s36 = scalar_select %p35, 0, %s34
      %s37 = ssub.s32 %s24, %s36
      %s38 = ssub.s32 %s25, %s32
      %s39 = sor.u32 %s37, %s38
      %p40 = scmp.eq.s32.totalorder %s39, 0
      %s42 = sadd.s32 %s41, 1
      %s43 = scalar_select %p40, %s41, %s42
      %p46 = pneg %p40
      %p47 = scmp.eq.s32.totalorder %s17, 1
      %p48 = por %p46, %p47
      %p49 = scmp.ne.s32.totalorder %s41, %s44
      %p50 = scmp.eq.s32.totalorder %s17, 0
      %p51 = por %p49, %p50
      %p52 = scmp.ne.s32.totalorder %s41, %s44
      %p53 = scmp.eq.s32.totalorder %s22, 1
      %p54 = por %p52, %p53
      %p55 = scmp.ne.s32.totalorder %s44, %s45
      %p56 = scmp.eq.s32.totalorder %s22, 0
      %p57 = por %p55, %p56
      %p58 = scmp.ne.s32.totalorder %s44, %s45
      %p59 = scmp.eq.s32.totalorder %s23, 1
      %p60 = por %p58, %p59
      %p62 = scmp.ne.s32.totalorder %s45, %s61
      %p63 = scmp.eq.s32.totalorder %s23, 0
      %p64 = por %p62, %p63
      %s65 = ssub.s32 %s24, %s36
      %s66 = ssub.s32 %s25, %s32
      %s67 = sor.u32 %s65, %s66
      %p68 = scmp.eq.s32.totalorder %s67, 0
      %s70 = sadd.s32 %s69, 1
      %s71 = scalar_select %p68, %s69, %s70
      %p74 = pneg %p68
      %p75 = scmp.eq.s32.totalorder %s17, 1
      %p76 = por %p74, %p75
      %p77 = scmp.ne.s32.totalorder %s69, %s72
      %p78 = scmp.eq.s32.totalorder %s17, 0
      %p79 = por %p77, %p78
      %p80 = scmp.ne.s32.totalorder %s69, %s72
      %p81 = scmp.eq.s32.totalorder %s22, 1
      %p82 = por %p80, %p81
      %p83 = scmp.ne.s32.totalorder %s72, %s73
      %p84 = scmp.eq.s32.totalorder %s22, 0
      %p85 = por %p83, %p84
      %p86 = scmp.ne.s32.totalorder %s72, %s73
      %p87 = scmp.eq.s32.totalorder %s23, 1
      %p88 = por %p86, %p87
      %p90 = scmp.ne.s32.totalorder %s73, %s89
      %p91 = scmp.eq.s32.totalorder %s23, 0
      %p92 = por %p90, %p91
      %s93 = ssub.s32 %s24, %s36
      %p94 = scmp.eq.s32.totalorder %s93, 0
      %s96 = sadd.s32 %s95, 1
      %s97 = scalar_select %p94, %s95, %s96
      %p100 = pneg %p94
      %p101 = scmp.eq.s32.totalorder %s17, 1
      %p102 = por %p100, %p101
      %p103 = scmp.ne.s32.totalorder %s95, %s98
      %p104 = scmp.eq.s32.totalorder %s17, 0
      %p105 = por %p103, %p104
      %p106 = scmp.ne.s32.totalorder %s95, %s98
      %p107 = scmp.eq.s32.totalorder %s22, 1
      %p108 = por %p106, %p107
      %p109 = scmp.ne.s32.totalorder %s98, %s99
      %p110 = scmp.eq.s32.totalorder %s22, 0
      %p111 = por %p109, %p110
      %p112 = scmp.ne.s32.totalorder %s98, %s99
      %p113 = scmp.eq.s32.totalorder %s23, 1
      %p114 = por %p112, %p113
      %p116 = scmp.ne.s32.totalorder %s99, %s115
      %p117 = scmp.eq.s32.totalorder %s23, 0
      %p118 = por %p116, %p117
      %p119 = scmp.le.s32.totalorder 1, %s17
      %p120 = scmp.lt.s32.totalorder %s17, 3
      %p121 = pnand %p119, %p120
      %p122 = pneg %p121
      // Predicated region
      $region9: #{tpu_custom_call.1} parent=5 // pred_check
        _
      $region10: #{tpu_custom_call.1} parent=5 // pred_check_branch
        %124 = sbr.rel (%p121) target = $region12
      $region11: #{tpu_custom_call.1} parent=5 // pred_region
        %s125 = ssub.s32 %s17, 1
      $region12: #{tpu_custom_call.1} parent=5 // pred_fallthru
        _
      %p126 = scmp.lt.s32.totalorder %s17, 2
      // Predicated region
      $region13: #{tpu_custom_call.1} parent=5 // pred_check
        %p127 = pneg %p126
      $region14: #{tpu_custom_call.1} parent=5 // pred_check_branch
        %129 = sbr.rel (%p127) target = $region16
      $region15: #{tpu_custom_call.1} parent=5 // pred_region
        // Predicated region
        $region17: #{tpu_custom_call.1} parent=15 // pred_check
          %p130 = pneg %p51
        $region18: #{tpu_custom_call.1} parent=15 // pred_check_branch
          %132 = sbr.rel (%p130) target = $region20
        $region19: #{tpu_custom_call.1} parent=15 // pred_region
          %s133 = sand.u32 %s41, 1
          %s134 = scalar_lea.sflag [#allocation5], %s133
          %s135 = sand.u32 %s41, 1
          %s136 = smul.addr %s135, 8
          %s137 = scalar_lea.vmem [#allocation4], %s136
          %139 = vsyncadd %s134, 0
          %s140 = sadd.s32 %s25, %s24
          %s141 = smul.addr %s140, 8
          %s142 = scalar_lea.hbm %s0, %s141
          %s144 = sshll.u32 %s142, 4
          %s145 = int_to_ptr.hbm [resolvable:$true] %s144
          %s146 = sshll.u32 %s137, 4
          %s147 = int_to_ptr.vmem [resolvable:$true] %s146
          %149 = dma.hbm_to_vmem [thread:$0]  %s145, 128, %s147, %s134
        $region20: #{tpu_custom_call.1} parent=15 // pred_fallthru
          _
        // Predicated region
        $region21: #{tpu_custom_call.1} parent=15 // pred_check
          %p150 = pneg %p79
        $region22: #{tpu_custom_call.1} parent=15 // pred_check_branch
          %152 = sbr.rel (%p150) target = $region24
        $region23: #{tpu_custom_call.1} parent=15 // pred_region
          %s153 = sand.u32 %s69, 1
          %s154 = scalar_lea.sflag [#allocation8], %s153
          %s155 = sand.u32 %s69, 1
          %s156 = smul.addr %s155, 8
          %s157 = scalar_lea.vmem [#allocation7], %s156
          %159 = vsyncadd %s154, 0
          %s160 = sadd.s32 %s25, %s24
          %s161 = smul.addr %s160, 8
          %s162 = scalar_lea.hbm %s1, %s161
          %s164 = sshll.u32 %s162, 4
          %s165 = int_to_ptr.hbm [resolvable:$true] %s164
          %s166 = sshll.u32 %s157, 4
          %s167 = int_to_ptr.vmem [resolvable:$true] %s166
          %169 = dma.hbm_to_vmem [thread:$0]  %s165, 128, %s167, %s154
        $region24: #{tpu_custom_call.1} parent=15 // pred_fallthru
          _
      $region16: #{tpu_custom_call.1} parent=5 // pred_fallthru
        _
      %p170 = scmp.le.s32.totalorder 1, %s17
      %p171 = scmp.lt.s32.totalorder %s17, 3
      %p172 = pnand %p170, %p171
      %p173 = pneg %p172
      // Predicated region
      $region25: #{tpu_custom_call.1} parent=5 // pred_check
        _
      $region26: #{tpu_custom_call.1} parent=5 // pred_check_branch
        %175 = sbr.rel (%p172) target = $region28
      $region27: #{tpu_custom_call.1} parent=5 // pred_region
        %s176 = ssub.s32 %s17, 1
        %s177 = sand.u32 %s44, 1
        %s178 = scalar_lea.sflag [#allocation5], %s177
        %s179 = sand.u32 %s44, 1
        %s180 = smul.addr %s179, 8
        %s181 = scalar_lea.vmem [#allocation4], %s180
        // Predicated region
        $region29: #{tpu_custom_call.1} parent=27 // pred_check
          %p182 = pneg %p57
        $region30: #{tpu_custom_call.1} parent=27 // pred_check_branch
          %184 = sbr.rel (%p182) target = $region32
        $region31: #{tpu_custom_call.1} parent=27 // pred_region
          %186 = dma.done %s178, 128
        $region32: #{tpu_custom_call.1} parent=27 // pred_fallthru
          _
        %s187 = sand.u32 %s72, 1
        %s188 = scalar_lea.sflag [#allocation8], %s187
        %s189 = sand.u32 %s72, 1
        %s190 = smul.addr %s189, 8
        %s191 = scalar_lea.vmem [#allocation7], %s190
        // Predicated region
        $region33: #{tpu_custom_call.1} parent=27 // pred_check
          %p192 = pneg %p85
        $region34: #{tpu_custom_call.1} parent=27 // pred_check_branch
          %194 = sbr.rel (%p192) target = $region36
        $region35: #{tpu_custom_call.1} parent=27 // pred_region
          %196 = dma.done %s188, 128
        $region36: #{tpu_custom_call.1} parent=27 // pred_fallthru
          _
        %s197 = sand.u32 %s44, 1
        %s198 = scalar_lea.sflag [#allocation5], %s197
        %s199 = sand.u32 %s44, 1
        %s200 = smul.addr %s199, 8
        %s201 = scalar_lea.vmem [#allocation4], %s200
        %p202 = pneg %p57
        %p203 = pneg %p54
        %s204 = sand.u32 %s72, 1
        %s205 = scalar_lea.sflag [#allocation8], %s204
        %s206 = sand.u32 %s72, 1
        %s207 = smul.addr %s206, 8
        %s208 = scalar_lea.vmem [#allocation7], %s207
        %p209 = pneg %p85
        %p210 = pneg %p82
        %p211 = pneg %p111
        %p212 = pneg %p108
        %s213 = sand.u32 %s98, 1
        %s214 = scalar_lea.sflag [#allocation6], %s213
        %s215 = sand.u32 %s98, 1
        %s216 = smul.addr %s215, 8
        %s217 = scalar_lea.vmem [#allocation9], %s216
        %p218 = scmp.eq.s32.totalorder %s27, 0
        // Predicated region
        $region37: #{tpu_custom_call.1} parent=27 // pred_check
          %p219 = pneg %p218
        $region38: #{tpu_custom_call.1} parent=27 // pred_check_branch
          %221 = sbr.rel (%p219) target = $region40
        $region39: #{tpu_custom_call.1} parent=27 // pred_region
          %222 = vst [vmem:[#allocation2] sm:$0xff] 0.0
          %223 = vst [vmem:[#allocation3] sm:$0xff] 0.0
        $region40: #{tpu_custom_call.1} parent=27 // pred_fallthru
          _
        %v224 = vld [vmem:[%s181] sm:$0xff]
        %v225 = vld [vmem:[%s191] sm:$0xff]
        %v226 = vld [vmem:[#allocation2] sm:$0xff]
        %v227 = vmul.f32 %v224, %v225
        %v228 = vadd.f32 %v226, %v227
        %229 = vst [vmem:[#allocation2] sm:$0xff] %v228
        %v230 = vld [vmem:[#allocation3] sm:$0xff]
        %v231 = vadd.f32 %v224, %v225
        %v232 = vadd.f32 %v230, %v231
        %233 = vst [vmem:[#allocation3] sm:$0xff] %v232
        // Predicated region
        $region41: #{tpu_custom_call.1} parent=27 // pred_check
          %p234 = pneg %p218
        $region42: #{tpu_custom_call.1} parent=27 // pred_check_branch
          %236 = sbr.rel (%p234) target = $region44
        $region43: #{tpu_custom_call.1} parent=27 // pred_region
          %v237 = vld [vmem:[#allocation2] sm:$0xff]
          %238 = vadd.xlane.f32.xlu0 %v237
          %v239 = vpop.xlane.xlu0 %238
          %v240 = vrot.slane %v239, 4
          %v241 = vadd.f32 %v239, %v240
          %v242 = vrot.slane %v241, 2
          %v243 = vadd.f32 %v241, %v242
          %v244 = vrot.slane %v243, 1
          %v245 = vadd.f32 %v243, %v244
          %s246 = vtos %v245
          %v247 = vld [vmem:[#allocation3] sm:$0xff]
          %248 = vadd.xlane.f32.xlu0 %v247
          %v249 = vpop.xlane.xlu0 %248
          %v250 = vrot.slane %v249, 4
          %v251 = vadd.f32 %v249, %v250
          %v252 = vrot.slane %v251, 2
          %v253 = vadd.f32 %v251, %v252
          %v254 = vrot.slane %v253, 1
          %v255 = vadd.f32 %v253, %v254
          %s256 = vtos %v255
          %v257 = vlaneseq
          %v258 = vshrl.u32 %v257, 7
          %vm259 = vcmp.eq.s32.totalorder %v258, 0
          %vm260 = vcmp.eq.s32.totalorder %v258, 1
          %v261 = vstv %s256
          %v262 = vsel %vm260, %v261, 0.0
          %v263 = vstv %s246
          %v264 = vsel %vm259, %v263, %v262
          %265 = vst [vmem:[%s217] sm:$0xff] %v264
        $region44: #{tpu_custom_call.1} parent=27 // pred_fallthru
          _
        %s266 = sand.u32 %s98, 1
        %s267 = scalar_lea.sflag [#allocation6], %s266
        %s268 = sand.u32 %s98, 1
        %s269 = smul.addr %s268, 8
        %s270 = scalar_lea.vmem [#allocation9], %s269
        // Predicated region
        $region45: #{tpu_custom_call.1} parent=27 // pred_check
          %p271 = pneg %p108
        $region46: #{tpu_custom_call.1} parent=27 // pred_check_branch
          %273 = sbr.rel (%p271) target = $region48
        $region47: #{tpu_custom_call.1} parent=27 // pred_region
          %275 = vsyncadd %s267, 0
          %s276 = smul.addr %s26, 8
          %s277 = scalar_lea.hbm %s2, %s276
          %s279 = sshll.u32 %s270, 4
          %s280 = int_to_ptr.vmem [resolvable:$true] %s279
          %s281 = sshll.u32 %s277, 4
          %s282 = int_to_ptr.hbm [resolvable:$true] %s281
          %284 = dma.vmem_to_hbm [thread:$0]  %s280, 128, %s282, %s267
        $region48: #{tpu_custom_call.1} parent=27 // pred_fallthru
          _
      $region28: #{tpu_custom_call.1} parent=5 // pred_fallthru
        _
      %p285 = scmp.le.s32.totalorder 2, %s17
      // Predicated region
      $region49: #{tpu_custom_call.1} parent=5 // pred_check
        %p286 = pneg %p285
      $region50: #{tpu_custom_call.1} parent=5 // pred_check_branch
        %288 = sbr.rel (%p286) target = $region52
      $region51: #{tpu_custom_call.1} parent=5 // pred_region
        %s289 = ssub.s32 %s17, 2
        // Predicated region
        $region53: #{tpu_custom_call.1} parent=51 // pred_check
          %p290 = pneg %p114
        $region54: #{tpu_custom_call.1} parent=51 // pred_check_branch
          %292 = sbr.rel (%p290) target = $region56
        $region55: #{tpu_custom_call.1} parent=51 // pred_region
          %s293 = sand.u32 %s99, 1
          %s294 = scalar_lea.sflag [#allocation6], %s293
          %s295 = sand.u32 %s99, 1
          %s296 = smul.addr %s295, 8
          %s297 = scalar_lea.vmem [#allocation9], %s296
          %299 = dma.done %s294, 128
        $region56: #{tpu_custom_call.1} parent=51 // pred_fallthru
          _
      $region52: #{tpu_custom_call.1} parent=5 // pred_fallthru
        _
    $region6: #{tpu_custom_call.1} parent=1 // loop_footer
      %s21 = sadd.s32 1, %s17
    $region7: #{tpu_custom_call.1} parent=1 // loop_footer_branch
      %16 = sbr.rel target = $region3
    $region8: #{tpu_custom_call.1} parent=1 // loop_exit
      _
    %300 = vsyncpa [#allocation5], 1
    %s301 = scalar_lea.sflag [#allocation5], 1
    %302 = vsyncpa %s301, 1
    %303 = vsyncpa [#allocation8], 1
    %s304 = scalar_lea.sflag [#allocation8], 1
    %305 = vsyncpa %s304, 1
    %306 = vsyncpa [#allocation6], 1
    %s307 = scalar_lea.sflag [#allocation6], 1
    %308 = vsyncpa %s307, 1

</llo_original>
